<compile_context>
chip_gen: v5e
topology: v5e:2x2
jax: 0.10.0
libtpu: 0.0.40
codegen_flags: <defaults>
</compile_context>

<pallas_src>
import functools

import jax
import jax.numpy as jnp
from jax.experimental import pallas as pl
from jax.experimental.pallas import tpu as pltpu


def _make_ff_kernel(use_bf16):
    cdt = jnp.bfloat16 if use_bf16 else jnp.float32

    def ff_kernel(x_ref, w1_ref, b1_ref, w2_ref, b2_ref, w3_ref, b3_ref, out_ref):
        # Feature-major layout: x_ref (in_f, bm), out_ref (out_f, bm); batch -> lanes.
        xT = x_ref[...]                        # (in_f, bm)
        in_f, bm = xT.shape
        w1 = w1_ref[...]                       # (H1, in_f)

        # Layer 1: K = in_f (4) is far too small for the MXU -> VPU broadcast FMAs (f32).
        acc = jnp.broadcast_to(b1_ref[...], (w1.shape[0], bm))   # (H1, bm)
        for k in range(in_f):                  # static tiny loop
            acc = acc + w1[:, k:k + 1] * xT[k:k + 1, :]
        h1 = jnp.tanh(acc.astype(cdt))         # (H1, bm); bf16 tanh on v6e/v7x

        # Layer 2: (H2, H1) @ (H1, bm) on the MXU, f32 accumulation.
        pre2 = jnp.dot(w2_ref[...].astype(cdt), h1,
                       preferred_element_type=jnp.float32) + b2_ref[...]
        h2 = jnp.tanh(pre2.astype(cdt))        # (H2, bm)

        # Layer 3: pre-activation returned (final_act=False, non-residual).
        s = jnp.dot(w3_ref[...].astype(cdt), h2,
                    preferred_element_type=jnp.float32) + b3_ref[...]
        out_ref[...] = s.astype(out_ref.dtype)  # (out_f, bm) lane-dense unmasked store

    return ff_kernel


@functools.partial(jax.jit, static_argnames=("bm_cap", "use_bf16"))
def _ff_forward_jit(x, weights, biases, *, bm_cap, use_bf16):
    B, in_f = x.shape
    (w1, b1), (w2, b2), (w3, b3) = zip(weights, biases)
    out_f = w3.shape[0]

    # Tile choice: one grid step (bm = 128*cdiv(B,128)) whenever it fits under the
    # cap -- a sub-microsecond kernel gains nothing from being split, and each grid
    # step costs ~0.35 us of fixed overhead.  For large B, cap at bm_cap (multiple
    # of 128); the batch axis is marked "parallel" so the multi-step grid shards
    # across both v7x TensorCores.
    bm = min(128 * pl.cdiv(B, 128), bm_cap)
    B_pad = bm * pl.cdiv(B, bm)

    # Glue (fused under jit): feature-major activations, 2-D biases.  Padded batch
    # columns compute harmless tanh(bias-only) values and are clipped below.
    xT = x.T                                           # (in_f, B)
    if B_pad != B:
        xT = jnp.pad(xT, ((0, 0), (0, B_pad - B)))
    b1r, b2r, b3r = (b.reshape(-1, 1) for b in (b1, b2, b3))

    grid = (B_pad // bm,)
    full = lambda a: pl.BlockSpec(a.shape, lambda i: (0,) * a.ndim)

    # Advisory cost hint for the XLA scheduler around the custom call.
    flops = 2 * B_pad * sum(int(w.shape[0]) * int(w.shape[1]) for w in (w1, w2, w3))
    transc = B_pad * (int(w1.shape[0]) + int(w2.shape[0]))
    bytes_acc = (4 * B_pad * (int(in_f) + int(out_f))
                 + 4 * sum(int(a.size) for a in (w1, b1, w2, b2, w3, b3)))

    out_T = pl.pallas_call(
        _make_ff_kernel(use_bf16),
        out_shape=jax.ShapeDtypeStruct((out_f, B_pad), jnp.float32),
        grid_spec=pltpu.PrefetchScalarGridSpec(
            num_scalar_prefetch=0,
            grid=grid,
            in_specs=[
                pl.BlockSpec((in_f, bm), lambda i: (0, i)),   # x tiled over batch (lanes)
                full(w1), full(b1r),
                full(w2), full(b2r),
                full(w3), full(b3r),
            ],
            out_specs=pl.BlockSpec((out_f, bm), lambda i: (0, i)),
        ),
        compiler_params=pltpu.CompilerParams(dimension_semantics=("parallel",)),
        cost_estimate=pl.CostEstimate(flops=flops, transcendentals=transc,
                                      bytes_accessed=bytes_acc),
    )(xT, w1, b1r, w2, b2r, w3, b3r)

    return out_T[:, :B].T                               # (B, out_f)


def _default_use_bf16():
    # bf16 tanh / bf16 MXU inputs pay off on v6e/v7x (bf16-native EUP/VPU/MXU);
    # on v5e/v4 bf16 only adds convert ops, so stay f32 there.
    kind = jax.devices()[0].device_kind.lower()
    return ("v6" in kind) or ("v7" in kind)


def ff_forward(x, weights, biases, *, bm_cap=2048, use_bf16=None):
    """x: (B, in_f) f32.  weights[i]: (out_f, in_f) like torch.nn.Linear.  biases[i]: (out_f,)."""
    if use_bf16 is None:
        use_bf16 = _default_use_bf16()
    return _ff_forward_jit(x, tuple(weights), tuple(biases),
                           bm_cap=int(bm_cap), use_bf16=bool(use_bf16))


def _ref_forward(x, weights, biases):
    h = x
    s = None
    for w, b in zip(weights, biases):
        s = h @ w.T + b
        h = jnp.tanh(s)
    return s  # final_act=False, non-residual


if __name__ == "__main__":
    # layers = [(out_f, in_f), ...] as in FF.__init__; cartpole state dim = 4.
    layers = [(32, 4), (32, 32), (1, 32)]
    B = 300  # non-multiple of 128 -> exercises padding; single grid step (bm=384)

    key = jax.random.PRNGKey(0)
    keys = jax.random.split(key, 2 * len(layers) + 1)

    weights, biases = [], []
    for j, (out_f, in_f) in enumerate(layers):
        # Deterministic synthetic init (kaiming-uniform-ish scale); zero biases
        # (matches the nn.init.zeros_ default path of the non-residual branch).
        bound = 1.0 / jnp.sqrt(jnp.float32(in_f))
        w = jax.random.uniform(keys[2 * j], (out_f, in_f), jnp.float32, -bound, bound)
        b = jnp.zeros((out_f,), jnp.float32)
        weights.append(w)
        biases.append(b)

    x = jax.random.normal(keys[-1], (B, layers[0][1]), jnp.float32)

    use_bf16 = _default_use_bf16()
    out = ff_forward(x, weights, biases, use_bf16=use_bf16)
    out = jax.block_until_ready(out)

    ref = _ref_forward(x, weights, biases)
    assert out.shape == (B, layers[-1][0])
    tol = 5e-2 if use_bf16 else 1e-5   # bf16 tanh/MXU path is intentionally lower precision
    assert jnp.allclose(out, ref, atol=tol, rtol=tol), "mismatch vs reference"

    print("KERNEL_OK")
</pallas_src>

<mosaic_0001>
module attributes {stable_mosaic.version = 11 : i64} {
  func.func @ff_kernel(%arg0: i32, %arg1: memref<4x384xf32, #tpu.memory_space<vmem>>, %arg2: memref<32x4xf32, #tpu.memory_space<vmem>>, %arg3: memref<32x1xf32, #tpu.memory_space<vmem>>, %arg4: memref<32x32xf32, #tpu.memory_space<vmem>>, %arg5: memref<32x1xf32, #tpu.memory_space<vmem>>, %arg6: memref<1x32xf32, #tpu.memory_space<vmem>>, %arg7: memref<1x1xf32, #tpu.memory_space<vmem>>, %arg8: memref<1x384xf32, #tpu.memory_space<vmem>>) attributes {dimension_semantics = [#tpu.dimension_semantics<parallel>], iteration_bounds = array<i64: 1>, scalar_prefetch = 0 : i64, scratch_operands = 0 : i64, tpu.core_type = #tpu.core_type<tc>, window_params = [{transform_indices = @transform_0, window_bounds = array<i64: 4, 384>}, {pipeline_mode = #tpu.pipeline_mode<synchronous>, transform_indices = @transform_1, window_bounds = array<i64: 32, 4>}, {pipeline_mode = #tpu.pipeline_mode<synchronous>, transform_indices = @transform_2, window_bounds = array<i64: 32, 1>}, {pipeline_mode = #tpu.pipeline_mode<synchronous>, transform_indices = @transform_3, window_bounds = array<i64: 32, 32>}, {pipeline_mode = #tpu.pipeline_mode<synchronous>, transform_indices = @transform_4, window_bounds = array<i64: 32, 1>}, {pipeline_mode = #tpu.pipeline_mode<synchronous>, transform_indices = @transform_5, window_bounds = array<i64: 1, 32>}, {pipeline_mode = #tpu.pipeline_mode<synchronous>, transform_indices = @transform_6, window_bounds = array<i64: 1, 1>}, {transform_indices = @transform_7, window_bounds = array<i64: 1, 384>}]} {
    %c0 = arith.constant 0 : index
    %c0_0 = arith.constant 0 : index
    %0 = vector.load %arg1[%c0, %c0_0] : memref<4x384xf32, #tpu.memory_space<vmem>>, vector<4x384xf32>
    %c0_1 = arith.constant 0 : index
    %c0_2 = arith.constant 0 : index
    %1 = vector.load %arg2[%c0_1, %c0_2] : memref<32x4xf32, #tpu.memory_space<vmem>>, vector<32x4xf32>
    %c0_3 = arith.constant 0 : index
    %c0_4 = arith.constant 0 : index
    %2 = vector.load %arg3[%c0_3, %c0_4] : memref<32x1xf32, #tpu.memory_space<vmem>>, vector<32x1xf32>
    %3 = vector.shape_cast %2 : vector<32x1xf32> to vector<32x1xf32>
    %4 = vector.broadcast %3 : vector<32x1xf32> to vector<32x384xf32>
    %5 = vector.extract_strided_slice %1 {offsets = [0, 0], sizes = [32, 1], strides = [1, 1]} : vector<32x4xf32> to vector<32x1xf32>
    %6 = vector.extract_strided_slice %0 {offsets = [0, 0], sizes = [1, 384], strides = [1, 1]} : vector<4x384xf32> to vector<1x384xf32>
    %7 = vector.broadcast %5 : vector<32x1xf32> to vector<32x384xf32>
    %8 = vector.broadcast %6 : vector<1x384xf32> to vector<32x384xf32>
    %9 = arith.mulf %7, %8 : vector<32x384xf32>
    %10 = arith.addf %4, %9 : vector<32x384xf32>
    %11 = vector.extract_strided_slice %1 {offsets = [0, 1], sizes = [32, 1], strides = [1, 1]} : vector<32x4xf32> to vector<32x1xf32>
    %12 = vector.extract_strided_slice %0 {offsets = [1, 0], sizes = [1, 384], strides = [1, 1]} : vector<4x384xf32> to vector<1x384xf32>
    %13 = vector.broadcast %11 : vector<32x1xf32> to vector<32x384xf32>
    %14 = vector.broadcast %12 : vector<1x384xf32> to vector<32x384xf32>
    %15 = arith.mulf %13, %14 : vector<32x384xf32>
    %16 = arith.addf %10, %15 : vector<32x384xf32>
    %17 = vector.extract_strided_slice %1 {offsets = [0, 2], sizes = [32, 1], strides = [1, 1]} : vector<32x4xf32> to vector<32x1xf32>
    %18 = vector.extract_strided_slice %0 {offsets = [2, 0], sizes = [1, 384], strides = [1, 1]} : vector<4x384xf32> to vector<1x384xf32>
    %19 = vector.broadcast %17 : vector<32x1xf32> to vector<32x384xf32>
    %20 = vector.broadcast %18 : vector<1x384xf32> to vector<32x384xf32>
    %21 = arith.mulf %19, %20 : vector<32x384xf32>
    %22 = arith.addf %16, %21 : vector<32x384xf32>
    %23 = vector.extract_strided_slice %1 {offsets = [0, 3], sizes = [32, 1], strides = [1, 1]} : vector<32x4xf32> to vector<32x1xf32>
    %24 = vector.extract_strided_slice %0 {offsets = [3, 0], sizes = [1, 384], strides = [1, 1]} : vector<4x384xf32> to vector<1x384xf32>
    %25 = vector.broadcast %23 : vector<32x1xf32> to vector<32x384xf32>
    %26 = vector.broadcast %24 : vector<1x384xf32> to vector<32x384xf32>
    %27 = arith.mulf %25, %26 : vector<32x384xf32>
    %28 = arith.addf %22, %27 : vector<32x384xf32>
    %29 = math.tanh %28 : vector<32x384xf32>
    %c0_5 = arith.constant 0 : index
    %c0_6 = arith.constant 0 : index
    %30 = vector.load %arg4[%c0_5, %c0_6] : memref<32x32xf32, #tpu.memory_space<vmem>>, vector<32x32xf32>
    %cst = arith.constant dense<0.000000e+00> : vector<32x384xf32>
    %31 = tpu.matmul %30, %29, %cst {dimension_numbers = #tpu.dot_dimension_numbers<[1], [0], [0], [1], [0, 0, 1, 1], [], []>} : vector<32x32xf32>, vector<32x384xf32>, vector<32x384xf32> -> vector<32x384xf32>
    %c0_7 = arith.constant 0 : index
    %c0_8 = arith.constant 0 : index
    %32 = vector.load %arg5[%c0_7, %c0_8] : memref<32x1xf32, #tpu.memory_space<vmem>>, vector<32x1xf32>
    %33 = vector.broadcast %32 : vector<32x1xf32> to vector<32x384xf32>
    %34 = arith.addf %31, %33 : vector<32x384xf32>
    %35 = math.tanh %34 : vector<32x384xf32>
    %c0_9 = arith.constant 0 : index
    %c0_10 = arith.constant 0 : index
    %36 = vector.load %arg6[%c0_9, %c0_10] : memref<1x32xf32, #tpu.memory_space<vmem>>, vector<1x32xf32>
    %cst_11 = arith.constant dense<0.000000e+00> : vector<1x384xf32>
    %37 = tpu.matmul %36, %35, %cst_11 {dimension_numbers = #tpu.dot_dimension_numbers<[1], [0], [0], [1], [0, 0, 1, 1], [], []>} : vector<1x32xf32>, vector<32x384xf32>, vector<1x384xf32> -> vector<1x384xf32>
    %c0_12 = arith.constant 0 : index
    %c0_13 = arith.constant 0 : index
    %38 = vector.load %arg7[%c0_12, %c0_13] : memref<1x1xf32, #tpu.memory_space<vmem>>, vector<1x1xf32>
    %39 = vector.broadcast %38 : vector<1x1xf32> to vector<1x384xf32>
    %40 = arith.addf %37, %39 : vector<1x384xf32>
    %c0_14 = arith.constant 0 : index
    %c0_15 = arith.constant 0 : index
    %41 = vector.load %arg8[%c0_14, %c0_15] : memref<1x384xf32, #tpu.memory_space<vmem>>, vector<1x384xf32>
    tpu.vector_store %arg8[%c0_14, %c0_15], %40 {strides = array<i32>} : memref<1x384xf32, #tpu.memory_space<vmem>>, vector<1x384xf32>,
    return
  }
  func.func @transform_0(%arg0: i32) -> (i32, i32) {
    %c0_i32 = arith.constant 0 : i32
    %c0_i32_0 = arith.constant 0 : i32
    return %c0_i32, %arg0 : i32, i32
  }
  func.func @transform_1(%arg0: i32) -> (i32, i32) {
    %c0_i32 = arith.constant 0 : i32
    %c0_i32_0 = arith.constant 0 : i32
    %c0_i32_1 = arith.constant 0 : i32
    return %c0_i32, %c0_i32_0 : i32, i32
  }
  func.func @transform_2(%arg0: i32) -> (i32, i32) {
    %c0_i32 = arith.constant 0 : i32
    %c0_i32_0 = arith.constant 0 : i32
    %c0_i32_1 = arith.constant 0 : i32
    return %c0_i32, %c0_i32_0 : i32, i32
  }
  func.func @transform_3(%arg0: i32) -> (i32, i32) {
    %c0_i32 = arith.constant 0 : i32
    %c0_i32_0 = arith.constant 0 : i32
    %c0_i32_1 = arith.constant 0 : i32
    return %c0_i32, %c0_i32_0 : i32, i32
  }
  func.func @transform_4(%arg0: i32) -> (i32, i32) {
    %c0_i32 = arith.constant 0 : i32
    %c0_i32_0 = arith.constant 0 : i32
    %c0_i32_1 = arith.constant 0 : i32
    return %c0_i32, %c0_i32_0 : i32, i32
  }
  func.func @transform_5(%arg0: i32) -> (i32, i32) {
    %c0_i32 = arith.constant 0 : i32
    %c0_i32_0 = arith.constant 0 : i32
    %c0_i32_1 = arith.constant 0 : i32
    return %c0_i32, %c0_i32_0 : i32, i32
  }
  func.func @transform_6(%arg0: i32) -> (i32, i32) {
    %c0_i32 = arith.constant 0 : i32
    %c0_i32_0 = arith.constant 0 : i32
    %c0_i32_1 = arith.constant 0 : i32
    return %c0_i32, %c0_i32_0 : i32, i32
  }
  func.func @transform_7(%arg0: i32) -> (i32, i32) {
    %c0_i32 = arith.constant 0 : i32
    %c0_i32_0 = arith.constant 0 : i32
    return %c0_i32, %arg0 : i32, i32
  }
}

</mosaic_0001>

<llo_original>
// kernel: _ff_forward_jit.1
$region0: #{_ff_forward_jit.1}
  #allocation0 [shape = 'u32[]', space=smem, size = 0x4, offset = 0x4, fixed_abs, tag = 'smem constant byte address 0x4 - core index']
  #allocation1 [shape = 'u32[72,128]{1,0:T(1,128)}', space=vmem, size = 0x9000, scoped, tag = 'internal scratch']
  #allocation2 [shape = 'f32[1,1]{1,0:T(1,128)S(1)}', space=vmem, size = 0x200, scoped, tag = 'scoped memory for _ff_forward_jit.1']
  %s0 = inlined_call_operand.vmem [shape: f32[4,384], index: 0, kind: input, shape index: {}]
  %s1 = inlined_call_operand.vmem [shape: f32[32,4], index: 1, kind: input, shape index: {}]
  %s2 = inlined_call_operand.vmem [shape: f32[32,1], index: 2, kind: input, shape index: {}]
  %s3 = inlined_call_operand.vmem [shape: f32[32,32], index: 3, kind: input, shape index: {}]
  %s4 = inlined_call_operand.vmem [shape: f32[32,1], index: 4, kind: input, shape index: {}]
  %s5 = inlined_call_operand.vmem [shape: f32[1,32], index: 5, kind: input, shape index: {}]
  %s6 = inlined_call_operand.<no memory space> [shape: f32[1,1], index: 6, kind: input, shape index: {}]
  %s7 = inlined_call_operand.vmem [shape: f32[1,384], index: 7, kind: output, shape index: {}]
  %s8 = sld [smem:[#allocation0]]
  $region38: #{_ff_forward_jit.1} parent=0
    _
  %s10 = ssub.s32 1, %s8
  %s11 = scalar_select 0, %s10, %s8
  %v12 = vstv %s6
  %13 = vst [vmem:[#allocation2] sm:$0x1] %v12
  // Predicated region
  $region2: #{_ff_forward_jit.1} parent=0 // pred_check
    _
  $region3: #{_ff_forward_jit.1} parent=0 // pred_check_branch
    %15 = sbr.rel (0) target = $region5
  $region4: #{_ff_forward_jit.1} parent=0 // pred_region
    _
  $region5: #{_ff_forward_jit.1} parent=0 // pred_fallthru
    _
  // Predicated region
  $region6: #{_ff_forward_jit.1} parent=0 // pred_check
    _
  $region7: #{_ff_forward_jit.1} parent=0 // pred_check_branch
    %17 = sbr.rel (0) target = $region9
  $region8: #{_ff_forward_jit.1} parent=0 // pred_region
    _
  $region9: #{_ff_forward_jit.1} parent=0 // pred_fallthru
    _
  // Predicated region
  $region10: #{_ff_forward_jit.1} parent=0 // pred_check
    _
  $region11: #{_ff_forward_jit.1} parent=0 // pred_check_branch
    %19 = sbr.rel (0) target = $region13
  $region12: #{_ff_forward_jit.1} parent=0 // pred_region
    _
  $region13: #{_ff_forward_jit.1} parent=0 // pred_fallthru
    _
  // Predicated region
  $region14: #{_ff_forward_jit.1} parent=0 // pred_check
    _
  $region15: #{_ff_forward_jit.1} parent=0 // pred_check_branch
    %21 = sbr.rel (0) target = $region17
  $region16: #{_ff_forward_jit.1} parent=0 // pred_region
    _
  $region17: #{_ff_forward_jit.1} parent=0 // pred_fallthru
    _
  // Predicated region
  $region18: #{_ff_forward_jit.1} parent=0 // pred_check
    _
  $region19: #{_ff_forward_jit.1} parent=0 // pred_check_branch
    %23 = sbr.rel (0) target = $region21
  $region20: #{_ff_forward_jit.1} parent=0 // pred_region
    _
  $region21: #{_ff_forward_jit.1} parent=0 // pred_fallthru
    _
  // Predicated region
  $region22: #{_ff_forward_jit.1} parent=0 // pred_check
    _
  $region23: #{_ff_forward_jit.1} parent=0 // pred_check_branch
    %25 = sbr.rel (0) target = $region25
  $region24: #{_ff_forward_jit.1} parent=0 // pred_region
    _
  $region25: #{_ff_forward_jit.1} parent=0 // pred_fallthru
    _
  // Predicated region
  $region26: #{_ff_forward_jit.1} parent=0 // pred_check
    _
  $region27: #{_ff_forward_jit.1} parent=0 // pred_check_branch
    %27 = sbr.rel (0) target = $region29
  $region28: #{_ff_forward_jit.1} parent=0 // pred_region
    _
  $region29: #{_ff_forward_jit.1} parent=0 // pred_fallthru
    _
  %v28 = vld [vmem:[%s0] sm:$0xff]
  %v29 = vld [vmem:[%s0 + $0x8] sm:$0xf]
  %v30 = vld [vmem:[%s1] sm:$0xff]
  %v31 = vld [vmem:[%s1 + $0x8] sm:$0xff]
  %v32 = vld [vmem:[%s1 + $0x10] sm:$0xff]
  %v33 = vld [vmem:[%s1 + $0x18] sm:$0xff]
  %v34 = vld [vmem:[%s2] sm:$0xff]
  %v35 = vld [vmem:[%s2 + $0x8] sm:$0xff]
  %v36 = vld [vmem:[%s2 + $0x10] sm:$0xff]
  %v37 = vld [vmem:[%s2 + $0x18] sm:$0xff]
  %39 = vset.pattern.permute.xlu0 0
  %40 = vperm.xlu0 %39, %v34
  %v41 = vpop.permute.xlu0 %40
  %44 = vset.pattern.permute.xlu0 0
  %45 = vperm.xlu0 %44, %v35
  %v46 = vpop.permute.xlu0 %45
  %49 = vset.pattern.permute.xlu0 0
  %50 = vperm.xlu0 %49, %v36
  %v51 = vpop.permute.xlu0 %50
  %54 = vset.pattern.permute.xlu0 0
  %55 = vperm.xlu0 %54, %v37
  %v56 = vpop.permute.xlu0 %55
  %59 = vset.pattern.permute.xlu0 0
  %60 = vperm.xlu0 %59, %v30
  %v61 = vpop.permute.xlu0 %60
  %64 = vset.pattern.permute.xlu0 0
  %65 = vperm.xlu0 %64, %v31
  %v66 = vpop.permute.xlu0 %65
  %69 = vset.pattern.permute.xlu0 0
  %70 = vperm.xlu0 %69, %v32
  %v71 = vpop.permute.xlu0 %70
  %74 = vset.pattern.permute.xlu0 0
  %75 = vperm.xlu0 %74, %v33
  %v76 = vpop.permute.xlu0 %75
  %v80 = vperm.slane %v28, 0
  %v81 = vperm.slane %v28, 4
  %v82 = vperm.slane %v29, 0
  %v86 = vperm.slane %v80, 0
  %v87 = vperm.slane %v81, 0
  %v88 = vperm.slane %v82, 0
  %v89 = vmul.f32 %v61, %v86
  %v90 = vmul.f32 %v61, %v87
  %v91 = vmul.f32 %v61, %v88
  %v92 = vmul.f32 %v66, %v86
  %v93 = vmul.f32 %v66, %v87
  %v94 = vmul.f32 %v66, %v88
  %v95 = vmul.f32 %v71, %v86
  %v96 = vmul.f32 %v71, %v87
  %v97 = vmul.f32 %v71, %v88
  %v98 = vmul.f32 %v76, %v86
  %v99 = vmul.f32 %v76, %v87
  %v100 = vmul.f32 %v76, %v88
  %v101 = vadd.f32 %v41, %v89
  %v102 = vadd.f32 %v41, %v90
  %v103 = vadd.f32 %v41, %v91
  %v104 = vadd.f32 %v46, %v92
  %v105 = vadd.f32 %v46, %v93
  %v106 = vadd.f32 %v46, %v94
  %v107 = vadd.f32 %v51, %v95
  %v108 = vadd.f32 %v51, %v96
  %v109 = vadd.f32 %v51, %v97
  %v110 = vadd.f32 %v56, %v98
  %v111 = vadd.f32 %v56, %v99
  %v112 = vadd.f32 %v56, %v100
  %113 = vset.pattern.permute.xlu0 1
  %114 = vperm.xlu0 %113, %v30
  %v115 = vpop.permute.xlu0 %114
  %117 = vset.pattern.permute.xlu0 1
  %118 = vperm.xlu0 %117, %v31
  %v119 = vpop.permute.xlu0 %118
  %121 = vset.pattern.permute.xlu0 1
  %122 = vperm.xlu0 %121, %v32
  %v123 = vpop.permute.xlu0 %122
  %125 = vset.pattern.permute.xlu0 1
  %126 = vperm.xlu0 %125, %v33
  %v127 = vpop.permute.xlu0 %126
  %v129 = vperm.slane %v28, 1
  %v130 = vperm.slane %v28, 5
  %v131 = vperm.slane %v29, 1
  %v135 = vperm.slane %v129, 1
  %v136 = vperm.slane %v130, 1
  %v137 = vperm.slane %v131, 1
  %v138 = vmul.f32 %v115, %v135
  %v139 = vmul.f32 %v115, %v136
  %v140 = vmul.f32 %v115, %v137
  %v141 = vmul.f32 %v119, %v135
  %v142 = vmul.f32 %v119, %v136
  %v143 = vmul.f32 %v119, %v137
  %v144 = vmul.f32 %v123, %v135
  %v145 = vmul.f32 %v123, %v136
  %v146 = vmul.f32 %v123, %v137
  %v147 = vmul.f32 %v127, %v135
  %v148 = vmul.f32 %v127, %v136
  %v149 = vmul.f32 %v127, %v137
  %v150 = vadd.f32 %v101, %v138
  %v151 = vadd.f32 %v102, %v139
  %v152 = vadd.f32 %v103, %v140
  %v153 = vadd.f32 %v104, %v141
  %v154 = vadd.f32 %v105, %v142
  %v155 = vadd.f32 %v106, %v143
  %v156 = vadd.f32 %v107, %v144
  %v157 = vadd.f32 %v108, %v145
  %v158 = vadd.f32 %v109, %v146
  %v159 = vadd.f32 %v110, %v147
  %v160 = vadd.f32 %v111, %v148
  %v161 = vadd.f32 %v112, %v149
  %162 = vset.pattern.permute.xlu0 2
  %163 = vperm.xlu0 %162, %v30
  %v164 = vpop.permute.xlu0 %163
  %166 = vset.pattern.permute.xlu0 2
  %167 = vperm.xlu0 %166, %v31
  %v168 = vpop.permute.xlu0 %167
  %170 = vset.pattern.permute.xlu0 2
  %171 = vperm.xlu0 %170, %v32
  %v172 = vpop.permute.xlu0 %171
  %174 = vset.pattern.permute.xlu0 2
  %175 = vperm.xlu0 %174, %v33
  %v176 = vpop.permute.xlu0 %175
  %v178 = vperm.slane %v28, 2
  %v179 = vperm.slane %v28, 6
  %v180 = vperm.slane %v29, 2
  %v184 = vperm.slane %v178, 2
  %v185 = vperm.slane %v179, 2
  %v186 = vperm.slane %v180, 2
  %v187 = vmul.f32 %v164, %v184
  %v188 = vmul.f32 %v164, %v185
  %v189 = vmul.f32 %v164, %v186
  %v190 = vmul.f32 %v168, %v184
  %v191 = vmul.f32 %v168, %v185
  %v192 = vmul.f32 %v168, %v186
  %v193 = vmul.f32 %v172, %v184
  %v194 = vmul.f32 %v172, %v185
  %v195 = vmul.f32 %v172, %v186
  %v196 = vmul.f32 %v176, %v184
  %v197 = vmul.f32 %v176, %v185
  %v198 = vmul.f32 %v176, %v186
  %v199 = vadd.f32 %v150, %v187
  %v200 = vadd.f32 %v151, %v188
  %v201 = vadd.f32 %v152, %v189
  %v202 = vadd.f32 %v153, %v190
  %v203 = vadd.f32 %v154, %v191
  %v204 = vadd.f32 %v155, %v192
  %v205 = vadd.f32 %v156, %v193
  %v206 = vadd.f32 %v157, %v194
  %v207 = vadd.f32 %v158, %v195
  %v208 = vadd.f32 %v159, %v196
  %v209 = vadd.f32 %v160, %v197
  %v210 = vadd.f32 %v161, %v198
  %211 = vset.pattern.permute.xlu0 3
  %212 = vperm.xlu0 %211, %v30
  %v213 = vpop.permute.xlu0 %212
  %215 = vset.pattern.permute.xlu0 3
  %216 = vperm.xlu0 %215, %v31
  %v217 = vpop.permute.xlu0 %216
  %219 = vset.pattern.permute.xlu0 3
  %220 = vperm.xlu0 %219, %v32
  %v221 = vpop.permute.xlu0 %220
  %223 = vset.pattern.permute.xlu0 3
  %224 = vperm.xlu0 %223, %v33
  %v225 = vpop.permute.xlu0 %224
  %v227 = vperm.slane %v28, 3
  %v228 = vperm.slane %v28, 7
  %v229 = vperm.slane %v29, 3
  %v233 = vperm.slane %v227, 3
  %v234 = vperm.slane %v228, 3
  %v235 = vperm.slane %v229, 3
  %v236 = vmul.f32 %v213, %v233
  %v237 = vmul.f32 %v213, %v234
  %v238 = vmul.f32 %v213, %v235
  %v239 = vmul.f32 %v217, %v233
  %v240 = vmul.f32 %v217, %v234
  %v241 = vmul.f32 %v217, %v235
  %v242 = vmul.f32 %v221, %v233
  %v243 = vmul.f32 %v221, %v234
  %v244 = vmul.f32 %v221, %v235
  %v245 = vmul.f32 %v225, %v233
  %v246 = vmul.f32 %v225, %v234
  %v247 = vmul.f32 %v225, %v235
  %v248 = vadd.f32 %v199, %v236
  %v249 = vadd.f32 %v200, %v237
  %v250 = vadd.f32 %v201, %v238
  %v251 = vadd.f32 %v202, %v239
  %v252 = vadd.f32 %v203, %v240
  %v253 = vadd.f32 %v204, %v241
  %v254 = vadd.f32 %v205, %v242
  %v255 = vadd.f32 %v206, %v243
  %v256 = vadd.f32 %v207, %v244
  %v257 = vadd.f32 %v208, %v245
  %v258 = vadd.f32 %v209, %v246
  %v259 = vadd.f32 %v210, %v247
  %v260 = vtanh.pop %v248
  %v261 = vtanh.pop %v249
  %v262 = vtanh.pop %v250
  %v263 = vtanh.pop %v251
  %v264 = vtanh.pop %v252
  %v265 = vtanh.pop %v253
  %v266 = vtanh.pop %v254
  %v267 = vtanh.pop %v255
  %v268 = vtanh.pop %v256
  %v269 = vtanh.pop %v257
  %v270 = vtanh.pop %v258
  %v271 = vtanh.pop %v259
  %v272 = vld [vmem:[%s3] sm:$0xff]
  %v273 = vld [vmem:[%s3 + $0x8] sm:$0xff]
  %v274 = vld [vmem:[%s3 + $0x10] sm:$0xff]
  %v275 = vld [vmem:[%s3 + $0x18] sm:$0xff]
  %v276 = vld [vmem:[%s4] sm:$0xff]
  %v277 = vld [vmem:[%s4 + $0x8] sm:$0xff]
  %v278 = vld [vmem:[%s4 + $0x10] sm:$0xff]
  %v279 = vld [vmem:[%s4 + $0x18] sm:$0xff]
  %281 = vset.pattern.permute.xlu0 0
  %282 = vperm.xlu0 %281, %v276
  %v283 = vpop.permute.xlu0 %282
  %286 = vset.pattern.permute.xlu0 0
  %287 = vperm.xlu0 %286, %v277
  %v288 = vpop.permute.xlu0 %287
  %291 = vset.pattern.permute.xlu0 0
  %292 = vperm.xlu0 %291, %v278
  %v293 = vpop.permute.xlu0 %292
  %296 = vset.pattern.permute.xlu0 0
  %297 = vperm.xlu0 %296, %v279
  %v298 = vpop.permute.xlu0 %297
  %vm300 = vcmask 261120
  %v302 = vsel %vm300, %v272, 0
  %v305 = vsel %vm300, %v273, 0
  %v308 = vsel %vm300, %v274, 0
  %v311 = vsel %vm300, %v275, 0
  %313 = vmatpush.msra.mxu0 0.0
  %314 = vmatpush.msra.mxu0 0.0
  %315 = vmatpush.msra.mxu0 0.0
  %316 = vmatpush.msra.mxu0 0.0
  %317 = vmatpush.msra.mxu0 0.0
  %318 = vmatpush.msra.mxu0 0.0
  %319 = vmatpush.msra.mxu0 0.0
  %320 = vmatpush.msra.mxu0 0.0
  %321 = vmatpush.msra.mxu0 0.0
  %322 = vmatpush.msra.mxu0 0.0
  %323 = vmatpush.msra.mxu0 0.0
  %324 = vmatpush.msra.mxu0 0.0
  %325 = vmatpush.msra.mxu0 %v269
  %326 = vmatpush.msra.mxu0 %v266
  %327 = vmatpush.msra.mxu0 %v263
  %328 = vmatpush.msra.mxu0 %v260
  %329 = vmatmul.f32.gmra.mxu0 %v302
  %v330 = vpop.f32.mrf.mxu0
  %v331 = vadd.f32 %v283, %v330
  %332 = vmatmul.f32.gmra.mxu0 %v305
  %v333 = vpop.f32.mrf.mxu0
  %v334 = vadd.f32 %v288, %v333
  %335 = vmatmul.f32.gmra.mxu0 %v308
  %v336 = vpop.f32.mrf.mxu0
  %v337 = vadd.f32 %v293, %v336
  %338 = vmatmul.f32.gmra.mxu0 %v311
  %v339 = vpop.f32.mrf.mxu0
  %v340 = vadd.f32 %v298, %v339
  %341 = vdwg.mxu0
  %342 = vmatpush.msra.mxu0 0.0
  %343 = vmatpush.msra.mxu0 0.0
  %344 = vmatpush.msra.mxu0 0.0
  %345 = vmatpush.msra.mxu0 0.0
  %346 = vmatpush.msra.mxu0 0.0
  %347 = vmatpush.msra.mxu0 0.0
  %348 = vmatpush.msra.mxu0 0.0
  %349 = vmatpush.msra.mxu0 0.0
  %350 = vmatpush.msra.mxu0 0.0
  %351 = vmatpush.msra.mxu0 0.0
  %352 = vmatpush.msra.mxu0 0.0
  %353 = vmatpush.msra.mxu0 0.0
  %354 = vmatpush.msra.mxu0 %v270
  %355 = vmatpush.msra.mxu0 %v267
  %356 = vmatpush.msra.mxu0 %v264
  %357 = vmatpush.msra.mxu0 %v261
  %358 = vmatmul.f32.gmra.mxu0 %v302
  %v359 = vpop.f32.mrf.mxu0
  %v360 = vadd.f32 %v283, %v359
  %361 = vmatmul.f32.gmra.mxu0 %v305
  %v362 = vpop.f32.mrf.mxu0
  %v363 = vadd.f32 %v288, %v362
  %364 = vmatmul.f32.gmra.mxu0 %v308
  %v365 = vpop.f32.mrf.mxu0
  %v366 = vadd.f32 %v293, %v365
  %367 = vmatmul.f32.gmra.mxu0 %v311
  %v368 = vpop.f32.mrf.mxu0
  %v369 = vadd.f32 %v298, %v368
  %370 = vdwg.mxu0
  %371 = vmatpush.msra.mxu0 0.0
  %372 = vmatpush.msra.mxu0 0.0
  %373 = vmatpush.msra.mxu0 0.0
  %374 = vmatpush.msra.mxu0 0.0
  %375 = vmatpush.msra.mxu0 0.0
  %376 = vmatpush.msra.mxu0 0.0
  %377 = vmatpush.msra.mxu0 0.0
  %378 = vmatpush.msra.mxu0 0.0
  %379 = vmatpush.msra.mxu0 0.0
  %380 = vmatpush.msra.mxu0 0.0
  %381 = vmatpush.msra.mxu0 0.0
  %382 = vmatpush.msra.mxu0 0.0
  %383 = vmatpush.msra.mxu0 %v271
  %384 = vmatpush.msra.mxu0 %v268
  %385 = vmatpush.msra.mxu0 %v265
  %386 = vmatpush.msra.mxu0 %v262
  %387 = vmatmul.f32.gmra.mxu0 %v302
  %v388 = vpop.f32.mrf.mxu0
  %v389 = vadd.f32 %v283, %v388
  %390 = vmatmul.f32.gmra.mxu0 %v305
  %v391 = vpop.f32.mrf.mxu0
  %v392 = vadd.f32 %v288, %v391
  %393 = vmatmul.f32.gmra.mxu0 %v308
  %v394 = vpop.f32.mrf.mxu0
  %v395 = vadd.f32 %v293, %v394
  %396 = vmatmul.f32.gmra.mxu0 %v311
  %v397 = vpop.f32.mrf.mxu0
  %v398 = vadd.f32 %v298, %v397
  %399 = vdwg.mxu0
  %v400 = vtanh.pop %v331
  %v401 = vtanh.pop %v360
  %v402 = vtanh.pop %v389
  %v403 = vtanh.pop %v334
  %v404 = vtanh.pop %v363
  %v405 = vtanh.pop %v392
  %v406 = vtanh.pop %v337
  %v407 = vtanh.pop %v366
  %v408 = vtanh.pop %v395
  %v409 = vtanh.pop %v340
  %v410 = vtanh.pop %v369
  %v411 = vtanh.pop %v398
  %v412 = vld [vmem:[%s5] sm:$0x1]
  %v413 = vld [vmem:[#allocation2] sm:$0x1]
  %415 = vset.pattern.permute.xlu0 0
  %416 = vperm.xlu0 %415, %v413
  %v417 = vpop.permute.xlu0 %416
  %v419 = vperm.slane %v417, 0
  %v421 = vsel %vm300, %v412, 0
  %423 = vmatpush.msra.mxu0 0.0
  %424 = vmatpush.msra.mxu0 0.0
  %425 = vmatpush.msra.mxu0 0.0
  %426 = vmatpush.msra.mxu0 0.0
  %427 = vmatpush.msra.mxu0 0.0
  %428 = vmatpush.msra.mxu0 0.0
  %429 = vmatpush.msra.mxu0 0.0
  %430 = vmatpush.msra.mxu0 0.0
  %431 = vmatpush.msra.mxu0 0.0
  %432 = vmatpush.msra.mxu0 0.0
  %433 = vmatpush.msra.mxu0 0.0
  %434 = vmatpush.msra.mxu0 0.0
  %435 = vmatpush.msra.mxu0 %v409
  %436 = vmatpush.msra.mxu0 %v406
  %437 = vmatpush.msra.mxu0 %v403
  %438 = vmatpush.msra.mxu0 %v400
  %439 = vmatmul.f32.gmra.mxu0 %v421
  %v440 = vpop.f32.mrf.mxu0
  %v441 = vadd.f32 %v419, %v440
  %442 = vdwg.mxu0
  %443 = vmatpush.msra.mxu0 0.0
  %444 = vmatpush.msra.mxu0 0.0
  %445 = vmatpush.msra.mxu0 0.0
  %446 = vmatpush.msra.mxu0 0.0
  %447 = vmatpush.msra.mxu0 0.0
  %448 = vmatpush.msra.mxu0 0.0
  %449 = vmatpush.msra.mxu0 0.0
  %450 = vmatpush.msra.mxu0 0.0
  %451 = vmatpush.msra.mxu0 0.0
  %452 = vmatpush.msra.mxu0 0.0
  %453 = vmatpush.msra.mxu0 0.0
  %454 = vmatpush.msra.mxu0 0.0
  %455 = vmatpush.msra.mxu0 %v410
  %456 = vmatpush.msra.mxu0 %v407
  %457 = vmatpush.msra.mxu0 %v404
  %458 = vmatpush.msra.mxu0 %v401
  %459 = vmatmul.f32.gmra.mxu0 %v421
  %v460 = vpop.f32.mrf.mxu0
  %v461 = vadd.f32 %v419, %v460
  %462 = vdwg.mxu0
  %463 = vmatpush.msra.mxu0 0.0
  %464 = vmatpush.msra.mxu0 0.0
  %465 = vmatpush.msra.mxu0 0.0
  %466 = vmatpush.msra.mxu0 0.0
  %467 = vmatpush.msra.mxu0 0.0
  %468 = vmatpush.msra.mxu0 0.0
  %469 = vmatpush.msra.mxu0 0.0
  %470 = vmatpush.msra.mxu0 0.0
  %471 = vmatpush.msra.mxu0 0.0
  %472 = vmatpush.msra.mxu0 0.0
  %473 = vmatpush.msra.mxu0 0.0
  %474 = vmatpush.msra.mxu0 0.0
  %475 = vmatpush.msra.mxu0 %v411
  %476 = vmatpush.msra.mxu0 %v408
  %477 = vmatpush.msra.mxu0 %v405
  %478 = vmatpush.msra.mxu0 %v402
  %479 = vmatmul.f32.gmra.mxu0 %v421
  %v480 = vpop.f32.mrf.mxu0
  %v481 = vadd.f32 %v419, %v480
  %482 = vdwg.mxu0
  %v486 = vrot.slane %v461, 7
  %v487 = vrot.slane %v481, 6
  %vm488 = vcmask 1040384
  %v489 = vsel %vm488, %v441, %v486
  %vm490 = vcmask 1041408
  %v491 = vsel %vm490, %v489, %v487
  %v493 = vlaneseq
  %vm494 = vcmp.ge.s32.totalorder %v493, 0
  %vm495 = vcmp.lt.s32.totalorder %v493, 384
  %vm496 = vmand %vm494, %vm495
  %497 = vst.msk [vmem:[%s7] sm:$0x7] %vm496, %v491
  // Predicated region
  $region30: #{_ff_forward_jit.1} parent=0 // pred_check
    _
  $region31: #{_ff_forward_jit.1} parent=0 // pred_check_branch
    %499 = sbr.rel (0) target = $region33
  $region32: #{_ff_forward_jit.1} parent=0 // pred_region
    _
  $region33: #{_ff_forward_jit.1} parent=0 // pred_fallthru
    _
  // Predicated region
  $region34: #{_ff_forward_jit.1} parent=0 // pred_check
    _
  $region35: #{_ff_forward_jit.1} parent=0 // pred_check_branch
    %501 = sbr.rel (0) target = $region37
  $region36: #{_ff_forward_jit.1} parent=0 // pred_region
    _
  $region37: #{_ff_forward_jit.1} parent=0 // pred_fallthru
    _

</llo_original>
